<compile_context>
chip_gen: v5e
topology: v5e:2x2
jax: 0.10.0
libtpu: 0.0.40
codegen_flags: <defaults>
</compile_context>

<pallas_src>
import math

import jax
import jax.numpy as jnp
from jax import lax
from jax.experimental import pallas as pl
from jax.experimental.pallas import tpu as pltpu

LANES = 128
MAX_TILE_ROWS = 8192           # 8192 * 128 * 4B = 4 MiB per input block (f32)
VMEM_LIMIT_BYTES = 40 << 20    # 2 inputs x 2 buffers x 4 MiB = 16 MiB + headroom


def _round_up(x, m):
    return ((x + m - 1) // m) * m


def _num_tensorcores():
    """Best-effort TensorCore count per chip (2 on v7x, 1 on v5e/v6e)."""
    try:
        info = pltpu.get_tpu_info()
        for name in ("num_cores", "num_tensorcores", "tensorcores_per_chip",
                     "num_cores_per_chip", "core_count"):
            v = getattr(info, name, None)
            if isinstance(v, int) and v > 0:
                return v
    except Exception:
        pass
    try:
        dev = jax.devices()[0]
        for name in ("num_cores", "core_count"):
            v = getattr(dev, name, None)
            if isinstance(v, int) and v > 0:
                return v
    except Exception:
        pass
    return 1


def _make_l1_partial_kernel(num_k, num_blocks, tile_rows, tail_valid_rows):
    """Kernel computing one partial sum of |x1 - x2| per parallel index."""
    needs_mask = tail_valid_rows != tile_rows

    def kernel(x1_ref, x2_ref, o_ref):
        p = pl.program_id(0)
        k = pl.program_id(1)

        @pl.when(k == 0)
        def _():
            o_ref[...] = jnp.zeros_like(o_ref)

        def accumulate(valid_rows=None):
            d = jnp.abs(x1_ref[...].astype(jnp.float32)
                        - x2_ref[...].astype(jnp.float32))
            if valid_rows is not None:
                # Zero out rows past the true extent (Pallas partial-block
                # padding is undefined on read).
                row = lax.broadcasted_iota(jnp.int32, d.shape, 0)
                d = jnp.where(row < valid_rows, d, 0.0)
            # Pure-VPU fold of the (tile_rows, 128) tile into the resident
            # (1, 8, 128) output/accumulator block (no per-step XLU reduce,
            # no SMEM scalar chain).
            o_ref[...] += jnp.sum(d.reshape(-1, 8, LANES), axis=0)[None]

        if not needs_mask:
            accumulate()
        else:
            is_tail = (p * num_k + k) == (num_blocks - 1)

            @pl.when(is_tail)
            def _():
                accumulate(tail_valid_rows)

            @pl.when(jnp.logical_not(is_tail))
            def _():
                accumulate()

    return kernel


def style_diversification_loss(x1, x2):
    """Pallas equivalent of torch.nn.L1Loss()(x1, x2) -> scalar mean |x1 - x2|."""
    assert x1.shape == x2.shape, "x1/x2 must share shapes (incl. batch dim)"
    # TODO(synk): utils.is_valid_image_tensor has no Pallas equivalent; only the
    # shape-compatibility check is reproduced here.

    total_count = math.prod(x1.shape)

    if total_count % LANES == 0:
        # Row-major reshape -> bitcast in XLA: no extra HBM pass.
        a = x1.reshape(-1, LANES)
        b = x2.reshape(-1, LANES)
    else:
        # TODO(synk): rare ragged case (total not a multiple of 128); the pad
        # costs one extra HBM read+write per input.  Zero padding is harmless
        # (|0 - 0| = 0) and the divide below uses the true element count.
        padded = _round_up(total_count, LANES * 32)
        a = jnp.pad(x1.reshape(-1), (0, padded - total_count)).reshape(-1, LANES)
        b = jnp.pad(x2.reshape(-1), (0, padded - total_count)).reshape(-1, LANES)

    rows = a.shape[0]

    # Tile selection: exact full-extent block when it fits (always legal, no
    # masking); otherwise a 32-row-aligned block (legal for f32/bf16/int8) with
    # in-kernel masking of the single boundary block.
    if rows <= MAX_TILE_ROWS and rows % 8 == 0:
        tile_rows = rows
    else:
        tile_rows = min(MAX_TILE_ROWS, _round_up(rows, 32))
    num_blocks = pl.cdiv(rows, tile_rows)
    tail_valid = rows - (num_blocks - 1) * tile_rows

    # Shard the partial-sum axis across TensorCores only when the chip has >1
    # TC and the blocks split evenly; otherwise a single partial (no redundant
    # accumulator reset/writeback on 1-TC chips).
    ncores = _num_tensorcores()
    num_partials = ncores if (ncores > 1 and num_blocks % ncores == 0) else 1
    num_k = num_blocks // num_partials

    kernel = _make_l1_partial_kernel(num_k, num_blocks, tile_rows, tail_valid)

    in_spec = pl.BlockSpec((tile_rows, LANES), lambda p, k: (p * num_k + k, 0))
    out_spec = pl.BlockSpec((1, 8, LANES), lambda p, k: (p, 0, 0))

    bytes_in = total_count * (x1.dtype.itemsize + x2.dtype.itemsize)
    cost = pl.CostEstimate(
        flops=3 * total_count,           # sub + abs + add per element
        transcendentals=0,
        bytes_accessed=bytes_in + num_partials * 8 * LANES * 4,
    )

    dims = ((pltpu.CORE_PARALLEL, pltpu.ARBITRARY) if num_partials > 1
            else (pltpu.PARALLEL, pltpu.ARBITRARY))

    partials = pl.pallas_call(
        kernel,
        out_shape=jax.ShapeDtypeStruct((num_partials, 8, LANES), jnp.float32),
        grid_spec=pltpu.PrefetchScalarGridSpec(
            num_scalar_prefetch=0,
            grid=(num_partials, num_k),          # reduction axis last
            in_specs=[in_spec, in_spec],
            out_specs=out_spec,
        ),
        compiler_params=pltpu.CompilerParams(
            dimension_semantics=dims,
            vmem_limit_bytes=VMEM_LIMIT_BYTES,
        ),
        cost_estimate=cost,
    )(a, b)

    # Single tiny cross-lane reduce + normalize by the true element count.
    return jnp.sum(partials) / jnp.float32(total_count)


if __name__ == "__main__":
    key = jax.random.PRNGKey(0)
    k1, k2 = jax.random.split(key)
    # NCHW images, batch=2, channels=4, 16x16 spatial
    x1 = jax.random.normal(k1, (2, 4, 16, 16), dtype=jnp.float32)
    x2 = jax.random.normal(k2, (2, 4, 16, 16), dtype=jnp.float32)

    loss = jax.block_until_ready(style_diversification_loss(x1, x2))

    ref = jnp.mean(jnp.abs(x1 - x2))
    assert jnp.allclose(loss, ref, rtol=1e-5, atol=1e-6), (loss, ref)
    print("KERNEL_OK")
</pallas_src>

<mosaic_0001>
module attributes {stable_mosaic.version = 11 : i64} {
  func.func @kernel(%arg0: i32, %arg1: i32, %arg2: memref<16x128xf32, #tpu.memory_space<vmem>>, %arg3: memref<16x128xf32, #tpu.memory_space<vmem>>, %arg4: memref<1x8x128xf32, #tpu.memory_space<vmem>>) attributes {dimension_semantics = [#tpu.dimension_semantics<parallel>, #tpu.dimension_semantics<arbitrary>], iteration_bounds = array<i64: 1, 1>, scalar_prefetch = 0 : i64, scratch_operands = 0 : i64, tpu.core_type = #tpu.core_type<tc>, window_params = [{transform_indices = @transform_0, window_bounds = array<i64: 16, 128>}, {transform_indices = @transform_1, window_bounds = array<i64: 16, 128>}, {transform_indices = @transform_2, window_bounds = array<i64: 1, 8, 128>}]} {
    %c0_i32 = arith.constant 0 : i32
    %0 = arith.cmpi eq, %arg1, %c0_i32 : i32
    %1 = arith.extui %0 : i1 to i32
    %c0_i32_0 = arith.constant 0 : i32
    %2 = arith.cmpi ne, %1, %c0_i32_0 : i32
    scf.if %2 {
      %cst_10 = arith.constant 0.000000e+00 : f32
      %13 = vector.broadcast %cst_10 : f32 to vector<1x8x128xf32>
      %c0_11 = arith.constant 0 : index
      %c0_12 = arith.constant 0 : index
      %c0_13 = arith.constant 0 : index
      %14 = vector.load %arg4[%c0_11, %c0_12, %c0_13] : memref<1x8x128xf32, #tpu.memory_space<vmem>>, vector<1x8x128xf32>
      tpu.vector_store %arg4[%c0_11, %c0_12, %c0_13], %13 {strides = array<i32>} : memref<1x8x128xf32, #tpu.memory_space<vmem>>, vector<1x8x128xf32>,
    } else {
    }
    %c0 = arith.constant 0 : index
    %c0_1 = arith.constant 0 : index
    %3 = vector.load %arg2[%c0, %c0_1] : memref<16x128xf32, #tpu.memory_space<vmem>>, vector<16x128xf32>
    %c0_2 = arith.constant 0 : index
    %c0_3 = arith.constant 0 : index
    %4 = vector.load %arg3[%c0_2, %c0_3] : memref<16x128xf32, #tpu.memory_space<vmem>>, vector<16x128xf32>
    %5 = arith.subf %3, %4 : vector<16x128xf32>
    %6 = math.absf %5 : vector<16x128xf32>
    %c0_4 = arith.constant 0 : index
    %c0_5 = arith.constant 0 : index
    %c0_6 = arith.constant 0 : index
    %7 = vector.load %arg4[%c0_4, %c0_5, %c0_6] : memref<1x8x128xf32, #tpu.memory_space<vmem>>, vector<1x8x128xf32>
    %8 = vector.shape_cast %6 : vector<16x128xf32> to vector<2x8x128xf32>
    %cst = arith.constant dense<0.000000e+00> : vector<8x128xf32>
    %9 = vector.multi_reduction <add>, %8, %cst [0] : vector<2x8x128xf32> to vector<8x128xf32>
    %10 = vector.shape_cast %9 : vector<8x128xf32> to vector<1x8x128xf32>
    %11 = arith.addf %7, %10 : vector<1x8x128xf32>
    %c0_7 = arith.constant 0 : index
    %c0_8 = arith.constant 0 : index
    %c0_9 = arith.constant 0 : index
    %12 = vector.load %arg4[%c0_7, %c0_8, %c0_9] : memref<1x8x128xf32, #tpu.memory_space<vmem>>, vector<1x8x128xf32>
    tpu.vector_store %arg4[%c0_7, %c0_8, %c0_9], %11 {strides = array<i32>} : memref<1x8x128xf32, #tpu.memory_space<vmem>>, vector<1x8x128xf32>,
    return
  }
  func.func @transform_0(%arg0: i32, %arg1: i32) -> (i32, i32) {
    %c1_i32 = arith.constant 1 : i32
    %0 = arith.muli %arg0, %c1_i32 : i32
    %1 = arith.addi %0, %arg1 : i32
    %c0_i32 = arith.constant 0 : i32
    %c0_i32_0 = arith.constant 0 : i32
    return %1, %c0_i32 : i32, i32
  }
  func.func @transform_1(%arg0: i32, %arg1: i32) -> (i32, i32) {
    %c1_i32 = arith.constant 1 : i32
    %0 = arith.muli %arg0, %c1_i32 : i32
    %1 = arith.addi %0, %arg1 : i32
    %c0_i32 = arith.constant 0 : i32
    %c0_i32_0 = arith.constant 0 : i32
    return %1, %c0_i32 : i32, i32
  }
  func.func @transform_2(%arg0: i32, %arg1: i32) -> (i32, i32, i32) {
    %c0_i32 = arith.constant 0 : i32
    %c0_i32_0 = arith.constant 0 : i32
    %c0_i32_1 = arith.constant 0 : i32
    return %arg0, %c0_i32, %c0_i32_0 : i32, i32, i32
  }
}

</mosaic_0001>

<llo_original>
// kernel: tpu_custom_call.1
$region0: #{tpu_custom_call.1}
  #allocation0 [shape = 'u32[]', space=smem, size = 0x4, offset = 0x4, fixed_abs, tag = 'smem constant byte address 0x4 - core index']
  #allocation1 [shape = 'u32[72,128]{1,0:T(1,128)}', space=vmem, size = 0x9000, scoped, tag = 'internal scratch']
  %s0 = inlined_call_operand.hbm [shape: f32[16,128], index: 0, kind: input, shape index: {}]
  %s1 = inlined_call_operand.hbm [shape: f32[16,128], index: 1, kind: input, shape index: {}]
  %s2 = inlined_call_operand.hbm [shape: f32[1,8,128], index: 2, kind: output, shape index: {}]
  %s3 = sld [smem:[#allocation0]]
  $region30: #{tpu_custom_call.1} parent=0
    _
  %s5 = ssub.s32 1, %s3
  %s6 = scalar_select 0, %s5, %s3
  $region1: #{tpu_custom_call.1} parent=0
    #allocation2 [shape = 'u8[8192]{0}', space=vmem, size = 0x2000, scoped, tag = 'input window, operand 0, single buffered']
    #allocation3 [shape = 's32[1]{0}', space=sflag, size = 0x4, scoped, tag = 'scoped memory for tpu_custom_call.1']
    #allocation4 [shape = 's32[1]{0}', space=sflag, size = 0x4, scoped, tag = 'scoped memory for tpu_custom_call.1']
    #allocation5 [shape = 'u8[8192]{0}', space=vmem, size = 0x2000, scoped, tag = 'input window, operand 1, single buffered']
    #allocation6 [shape = 's32[1]{0}', space=sflag, size = 0x4, scoped, tag = 'scoped memory for tpu_custom_call.1']
    #allocation7 [shape = 'u8[4096]{0}', space=vmem, size = 0x1000, scoped, tag = 'output window, operand 0, single buffered']
    %7 = vsyncpa [#allocation3], 0
    %8 = vsyncpa [#allocation6], 0
    %9 = vsyncpa [#allocation4], 0
    // Predicated region
    $region2: #{tpu_custom_call.1} parent=1 // pred_check
      _
    $region3: #{tpu_custom_call.1} parent=1 // pred_check_branch
      %11 = sbr.rel (0) target = $region5
    $region4: #{tpu_custom_call.1} parent=1 // pred_region
      %s12 = sadd.s32 0, 0
      %s13 = smul.u32 2, %s12
      %15 = vsyncadd [#allocation3], 0
      %s16 = smul.addr %s13, 8
      %s17 = scalar_lea.hbm %s0, %s16
      %s18 = sshll.u32 %s17, 4
      %s19 = int_to_ptr.hbm [resolvable:$true] %s18
      %s20 = sshll.u32 [#allocation2], 4
      %s21 = int_to_ptr.vmem [resolvable:$true] %s20
      %26 = dma.hbm_to_vmem [thread:$0]  %s19, 256, %s21, [#allocation3], 128, 128, 8
    $region5: #{tpu_custom_call.1} parent=1 // pred_fallthru
      _
    // Predicated region
    $region6: #{tpu_custom_call.1} parent=1 // pred_check
      _
    $region7: #{tpu_custom_call.1} parent=1 // pred_check_branch
      %28 = sbr.rel (0) target = $region9
    $region8: #{tpu_custom_call.1} parent=1 // pred_region
      %s29 = sadd.s32 0, 0
      %s30 = smul.u32 2, %s29
      %32 = vsyncadd [#allocation6], 0
      %s33 = smul.addr %s30, 8
      %s34 = scalar_lea.hbm %s1, %s33
      %s35 = sshll.u32 %s34, 4
      %s36 = int_to_ptr.hbm [resolvable:$true] %s35
      %s37 = sshll.u32 [#allocation5], 4
      %s38 = int_to_ptr.vmem [resolvable:$true] %s37
      %43 = dma.hbm_to_vmem [thread:$0]  %s36, 256, %s38, [#allocation6], 128, 128, 8
    $region9: #{tpu_custom_call.1} parent=1 // pred_fallthru
      _
    // Predicated region
    $region10: #{tpu_custom_call.1} parent=1 // pred_check
      _
    $region11: #{tpu_custom_call.1} parent=1 // pred_check_branch
      %45 = sbr.rel (0) target = $region13
    $region12: #{tpu_custom_call.1} parent=1 // pred_region
      %47 = dma.done [#allocation3], 256
    $region13: #{tpu_custom_call.1} parent=1 // pred_fallthru
      _
    // Predicated region
    $region14: #{tpu_custom_call.1} parent=1 // pred_check
      _
    $region15: #{tpu_custom_call.1} parent=1 // pred_check_branch
      %49 = sbr.rel (0) target = $region17
    $region16: #{tpu_custom_call.1} parent=1 // pred_region
      %51 = dma.done [#allocation6], 256
    $region17: #{tpu_custom_call.1} parent=1 // pred_fallthru
      _
    %s52 = sadd.s32 0, 0
    %s53 = smul.u32 2, %s52
    %s54 = sadd.s32 0, 0
    %s55 = smul.u32 2, %s54
    %p56 = scmp.eq.s32.totalorder 0, 0
    // Predicated region
    $region18: #{tpu_custom_call.1} parent=1 // pred_check
      %p57 = pneg %p56
    $region19: #{tpu_custom_call.1} parent=1 // pred_check_branch
      %59 = sbr.rel (%p57) target = $region21
    $region20: #{tpu_custom_call.1} parent=1 // pred_region
      %60 = vst [vmem:[#allocation7] sm:$0xff] 0.0
    $region21: #{tpu_custom_call.1} parent=1 // pred_fallthru
      _
    %v61 = vld [vmem:[#allocation2] sm:$0xff]
    %v62 = vld [vmem:[#allocation2 + $0x8] sm:$0xff]
    %v63 = vld [vmem:[#allocation5] sm:$0xff]
    %v64 = vld [vmem:[#allocation5 + $0x8] sm:$0xff]
    %v65 = vsub.f32 %v61, %v63
    %v66 = vsub.f32 %v62, %v64
    %v67 = vand.u32 2147483647, %v65
    %v68 = vand.u32 2147483647, %v66
    %v69 = vld [vmem:[#allocation7] sm:$0xff]
    %v70 = vadd.f32 %v67, %v68
    %v71 = vadd.f32 %v69, %v70
    %72 = vst [vmem:[#allocation7] sm:$0xff] %v71
    // Predicated region
    $region22: #{tpu_custom_call.1} parent=1 // pred_check
      _
    $region23: #{tpu_custom_call.1} parent=1 // pred_check_branch
      %74 = sbr.rel (0) target = $region25
    $region24: #{tpu_custom_call.1} parent=1 // pred_region
      %76 = vsyncadd [#allocation4], 0
      %s78 = sshll.u32 [#allocation7], 4
      %s79 = int_to_ptr.vmem [resolvable:$true] %s78
      %s80 = sshll.u32 %s2, 4
      %s81 = int_to_ptr.hbm [resolvable:$true] %s80
      %83 = dma.vmem_to_hbm [thread:$0]  %s79, 128, %s81, [#allocation4]
    $region25: #{tpu_custom_call.1} parent=1 // pred_fallthru
      _
    // Predicated region
    $region26: #{tpu_custom_call.1} parent=1 // pred_check
      _
    $region27: #{tpu_custom_call.1} parent=1 // pred_check_branch
      %85 = sbr.rel (0) target = $region29
    $region28: #{tpu_custom_call.1} parent=1 // pred_region
      %87 = dma.done [#allocation4], 128
    $region29: #{tpu_custom_call.1} parent=1 // pred_fallthru
      _
    %88 = vsyncpa [#allocation3], 1
    %89 = vsyncpa [#allocation6], 1
    %90 = vsyncpa [#allocation4], 1

</llo_original>
